<compile_context>
chip_gen: v6e
topology: v6e:2x2x1
jax: 0.10.0
libtpu: 0.0.40
codegen_flags: <defaults>
</compile_context>

<pallas_src>
import numpy as np
import jax
import jax.numpy as jnp
from jax.experimental import pallas as pl
from jax.experimental.pallas import tpu as pltpu


def _expert_kernel(gid_ref, x_ref, w1_ref, b1_ref, w2_ref, b2_ref, o_ref, acc_ref):
    # One grid step = (token tile i, hidden tile h). All tm tokens of the tile
    # belong to one expert, selected by the scalar-prefetched gid in the index_maps.
    h_idx = pl.program_id(1)

    @pl.when(h_idx == 0)
    def _init():
        acc_ref[...] = jnp.zeros_like(acc_ref)

    x = x_ref[...]                                                    # (tm, d_model) bf16
    h = jnp.dot(x, w1_ref[0], preferred_element_type=jnp.float32)     # (tm, tn) f32
    h = h + b1_ref[0]                                                 # (1, tn) broadcast
    # activation: GELU (tanh approximation; erf-exact differs only at ~1e-3 level)
    h = jax.nn.gelu(h, approximate=True)
    acc_ref[...] += jnp.dot(h.astype(w2_ref.dtype), w2_ref[0],
                            preferred_element_type=jnp.float32)       # (tm, d_model) f32

    @pl.when(h_idx == pl.num_programs(1) - 1)
    def _finalize():
        o_ref[...] = (acc_ref[...] + b2_ref[0]).astype(o_ref.dtype)


def _pick_tn(d_hidden, target=2048):
    """Largest multiple-of-128 divisor of d_hidden <= target (or d_hidden itself)."""
    if d_hidden <= target:
        return d_hidden
    for cand in range(target, 127, -128):
        if d_hidden % cand == 0:
            return cand
    return d_hidden


def expert_forward(inp, fwd_expert_count, w1, b1, w2, b2, *,
                   tm=128, tn=None, compute_dtype=jnp.bfloat16):
    """Pallas grouped-expert MLP.

    inp:  (T, d_model)  tokens sorted by expert
    fwd_expert_count: (E,) int, token count per expert (arbitrary, host-visible)
    w1:   (E, d_model, d_hidden)   b1: (E, d_hidden)
    w2:   (E, d_hidden, d_model)   b2: (E, d_model)
    Weights are stored transposed vs. PyTorch FMoELinear's [E, d_out, d_in] so the
    kernel computes x @ W directly.
    """
    counts = np.asarray(jax.device_get(fwd_expert_count)).astype(np.int64)
    T, d_model = inp.shape
    E, _, d_hidden = w1.shape
    assert int(counts.sum()) == T, "counts must sum to the number of tokens"
    if tn is None:
        tn = _pick_tn(d_hidden)
    assert d_hidden % tn == 0

    # ---- host-side glue: per-tile expert ids + pad/unpad gather indices ----
    gids, src_idx, dst_idx = [], [], []
    start = pstart = 0
    for e in range(E):
        c = int(counts[e])
        if c == 0:
            continue
        n_tiles_e = -(-c // tm)                    # ceil
        pc = n_tiles_e * tm
        gids.extend([e] * n_tiles_e)
        src_idx.extend(list(range(start, start + c)) + [T] * (pc - c))  # T -> OOB -> fill 0
        dst_idx.extend(range(pstart, pstart + c))
        start += c
        pstart += pc
    if not gids:
        return jnp.zeros_like(inp)

    T_pad = pstart
    num_tiles = T_pad // tm
    n_h = d_hidden // tn

    gid = jnp.asarray(np.array(gids, dtype=np.int32))
    src = jnp.asarray(np.array(src_idx, dtype=np.int32))
    dst = jnp.asarray(np.array(dst_idx, dtype=np.int32))

    # Single gather: pad each expert segment to a tm multiple (pad rows are zeros).
    x_pad = jnp.take(inp, src, axis=0, mode="fill", fill_value=0).astype(compute_dtype)

    # bf16 MXU operands; biases / accumulation stay f32.
    w1c = w1.astype(compute_dtype)
    w2c = w2.astype(compute_dtype)
    b1r = b1.astype(jnp.float32).reshape(E, 1, d_hidden)
    b2r = b2.astype(jnp.float32).reshape(E, 1, d_model)

    grid_spec = pltpu.PrefetchScalarGridSpec(
        num_scalar_prefetch=1,
        grid=(num_tiles, n_h),
        in_specs=[
            pl.BlockSpec((tm, d_model),     lambda i, h, gid: (i, 0)),
            pl.BlockSpec((1, d_model, tn),  lambda i, h, gid: (gid[i], 0, h)),
            pl.BlockSpec((1, 1, tn),        lambda i, h, gid: (gid[i], 0, h)),
            pl.BlockSpec((1, tn, d_model),  lambda i, h, gid: (gid[i], h, 0)),
            pl.BlockSpec((1, 1, d_model),   lambda i, h, gid: (gid[i], 0, 0)),
        ],
        out_specs=pl.BlockSpec((tm, d_model), lambda i, h, gid: (i, 0)),
        scratch_shapes=[pltpu.VMEM((tm, d_model), jnp.float32)],
    )

    cbytes = jnp.dtype(compute_dtype).itemsize
    obytes = jnp.dtype(inp.dtype).itemsize
    cost = pl.CostEstimate(
        flops=4 * T_pad * d_model * d_hidden,           # two matmuls, 2 flops/MAC
        transcendentals=T_pad * d_hidden,               # GELU
        bytes_accessed=(T_pad * d_model * (cbytes + obytes)
                        + num_tiles * 2 * d_model * d_hidden * cbytes
                        + num_tiles * (d_hidden + d_model) * 4),
    )

    # Double-buffered per-step working set estimate + resident accumulator.
    blk = (tm * d_model * cbytes          # x tile
           + d_model * tn * cbytes        # w1 tile
           + tn * 4                       # b1 tile (f32)
           + tn * d_model * cbytes        # w2 tile
           + d_model * 4                  # b2 tile (f32)
           + tm * d_model * obytes)       # out tile
    vmem_est = 2 * blk + tm * d_model * 4
    cp_kwargs = dict(dimension_semantics=("parallel", "arbitrary"))
    if vmem_est > (24 << 20):
        # Raise the scoped-VMEM limit only when the big-shape working set needs it.
        cp_kwargs["vmem_limit_bytes"] = min(int(vmem_est * 1.25) + (4 << 20), 112 << 20)

    out_pad = pl.pallas_call(
        _expert_kernel,
        out_shape=jax.ShapeDtypeStruct((T_pad, d_model), inp.dtype),
        grid_spec=grid_spec,
        compiler_params=pltpu.CompilerParams(**cp_kwargs),
        cost_estimate=cost,
    )(gid, x_pad, w1c, b1r, w2c, b2r)

    # ---- strip the per-expert padding back out (single gather) ----
    return jnp.take(out_pad, dst, axis=0)


def expert_ref(inp, counts_np, w1, b1, w2, b2):
    """Pure-JAX f32 reference (loop over experts, like FMoELinear's segmented GEMM)."""
    outs, start = [], 0
    for e in range(w1.shape[0]):
        c = int(counts_np[e])
        if c == 0:
            continue
        xe = inp[start:start + c]
        h = jax.nn.gelu(
            jnp.dot(xe, w1[e], precision=jax.lax.Precision.HIGHEST) + b1[e],
            approximate=True)
        oe = jnp.dot(h, w2[e], precision=jax.lax.Precision.HIGHEST) + b2[e]
        outs.append(oe)
        start += c
    return jnp.concatenate(outs, axis=0)


if __name__ == "__main__":
    # Small, deterministic example shapes (counts deliberately NOT multiples
    # of tm to exercise the padding path).
    num_expert, d_model, d_hidden = 2, 128, 256
    counts_np = np.array([8, 16], dtype=np.int32)          # tokens per expert
    T = int(counts_np.sum())                                # 24 tokens total

    key = jax.random.PRNGKey(0)
    kx, k1, k2, k3, k4 = jax.random.split(key, 5)

    x = jax.random.normal(kx, (T, d_model), jnp.float32)
    # Deterministic parameter init (synthetic; matches FMoELinear shapes,
    # stored transposed as [E, d_in, d_out]).
    w1 = 0.02 * jax.random.normal(k1, (num_expert, d_model, d_hidden), jnp.float32)
    b1 = 0.02 * jax.random.normal(k2, (num_expert, d_hidden), jnp.float32)
    w2 = 0.02 * jax.random.normal(k3, (num_expert, d_hidden, d_model), jnp.float32)
    b2 = 0.02 * jax.random.normal(k4, (num_expert, d_model), jnp.float32)

    counts = jnp.asarray(counts_np)

    out = expert_forward(x, counts, w1, b1, w2, b2)
    out = jax.block_until_ready(out)

    ref = expert_ref(x, counts_np, w1, b1, w2, b2)
    # bf16 MXU operands with f32 accumulation vs f32 reference -> loose tolerance.
    np.testing.assert_allclose(np.asarray(out), np.asarray(ref), rtol=5e-2, atol=5e-3)

    print("KERNEL_OK")
</pallas_src>

<mosaic_0001>
module attributes {stable_mosaic.version = 11 : i64} {
  func.func @_expert_kernel(%arg0: i32, %arg1: i32, %arg2: memref<2xi32, #tpu.memory_space<smem>>, %arg3: memref<128x128xbf16, #tpu.memory_space<vmem>>, %arg4: memref<1x128x256xbf16, #tpu.memory_space<vmem>>, %arg5: memref<1x1x256xf32, #tpu.memory_space<vmem>>, %arg6: memref<1x256x128xbf16, #tpu.memory_space<vmem>>, %arg7: memref<1x1x128xf32, #tpu.memory_space<vmem>>, %arg8: memref<128x128xf32, #tpu.memory_space<vmem>>, %arg9: memref<128x128xf32, #tpu.memory_space<vmem>>) attributes {dimension_semantics = [#tpu.dimension_semantics<parallel>, #tpu.dimension_semantics<arbitrary>], iteration_bounds = array<i64: 2, 1>, scalar_prefetch = 1 : i64, scratch_operands = 1 : i64, tpu.core_type = #tpu.core_type<tc>, window_params = [{transform_indices = @transform_0, window_bounds = array<i64: 128, 128>}, {transform_indices = @transform_1, window_bounds = array<i64: 1, 128, 256>}, {transform_indices = @transform_2, window_bounds = array<i64: 1, 1, 256>}, {transform_indices = @transform_3, window_bounds = array<i64: 1, 256, 128>}, {transform_indices = @transform_4, window_bounds = array<i64: 1, 1, 128>}, {transform_indices = @transform_5, window_bounds = array<i64: 128, 128>}]} {
    %c0_i32 = arith.constant 0 : i32
    %0 = arith.cmpi eq, %arg1, %c0_i32 : i32
    %1 = arith.extui %0 : i1 to i32
    %c0_i32_0 = arith.constant 0 : i32
    %2 = arith.cmpi ne, %1, %c0_i32_0 : i32
    scf.if %2 {
      %cst_22 = arith.constant 0.000000e+00 : f32
      %34 = vector.broadcast %cst_22 : f32 to vector<128x128xf32>
      %c0_23 = arith.constant 0 : index
      %c0_24 = arith.constant 0 : index
      %35 = vector.load %arg9[%c0_23, %c0_24] : memref<128x128xf32, #tpu.memory_space<vmem>>, vector<128x128xf32>
      tpu.vector_store %arg9[%c0_23, %c0_24], %34 {strides = array<i32>} : memref<128x128xf32, #tpu.memory_space<vmem>>, vector<128x128xf32>,
    } else {
    }
    %c0 = arith.constant 0 : index
    %c0_1 = arith.constant 0 : index
    %3 = vector.load %arg3[%c0, %c0_1] : memref<128x128xbf16, #tpu.memory_space<vmem>>, vector<128x128xbf16>
    %c0_2 = arith.constant 0 : index
    %c0_3 = arith.constant 0 : index
    %c0_4 = arith.constant 0 : index
    %4 = vector.load %arg4[%c0_2, %c0_3, %c0_4] : memref<1x128x256xbf16, #tpu.memory_space<vmem>>, vector<1x128x256xbf16>
    %5 = vector.shape_cast %4 : vector<1x128x256xbf16> to vector<128x256xbf16>
    %cst = arith.constant dense<0.000000e+00> : vector<128x256xf32>
    %6 = tpu.matmul %3, %5, %cst {dimension_numbers = #tpu.dot_dimension_numbers<[1], [0], [0], [1], [0, 0, 1, 1], [], []>} : vector<128x128xbf16>, vector<128x256xbf16>, vector<128x256xf32> -> vector<128x256xf32>
    %c0_5 = arith.constant 0 : index
    %c0_6 = arith.constant 0 : index
    %c0_7 = arith.constant 0 : index
    %7 = vector.load %arg5[%c0_5, %c0_6, %c0_7] : memref<1x1x256xf32, #tpu.memory_space<vmem>>, vector<1x1x256xf32>
    %8 = vector.shape_cast %7 : vector<1x1x256xf32> to vector<1x256xf32>
    %9 = vector.broadcast %8 : vector<1x256xf32> to vector<128x256xf32>
    %10 = arith.addf %6, %9 : vector<128x256xf32>
    %11 = arith.mulf %10, %10 : vector<128x256xf32>
    %12 = arith.mulf %10, %11 : vector<128x256xf32>
    %cst_8 = arith.constant 4.471500e-02 : f32
    %13 = vector.broadcast %cst_8 : f32 to vector<128x256xf32>
    %14 = arith.mulf %13, %12 : vector<128x256xf32>
    %15 = arith.addf %10, %14 : vector<128x256xf32>
    %cst_9 = arith.constant 0.797884583 : f32
    %16 = vector.broadcast %cst_9 : f32 to vector<128x256xf32>
    %17 = arith.mulf %16, %15 : vector<128x256xf32>
    %18 = math.tanh %17 : vector<128x256xf32>
    %cst_10 = arith.constant 1.000000e+00 : f32
    %19 = vector.broadcast %cst_10 : f32 to vector<128x256xf32>
    %20 = arith.addf %19, %18 : vector<128x256xf32>
    %cst_11 = arith.constant 5.000000e-01 : f32
    %21 = vector.broadcast %cst_11 : f32 to vector<128x256xf32>
    %22 = arith.mulf %21, %20 : vector<128x256xf32>
    %23 = arith.mulf %10, %22 : vector<128x256xf32>
    %c0_12 = arith.constant 0 : index
    %c0_13 = arith.constant 0 : index
    %24 = vector.load %arg9[%c0_12, %c0_13] : memref<128x128xf32, #tpu.memory_space<vmem>>, vector<128x128xf32>
    %25 = arith.truncf %23 : vector<128x256xf32> to vector<128x256xbf16>
    %c0_14 = arith.constant 0 : index
    %c0_15 = arith.constant 0 : index
    %c0_16 = arith.constant 0 : index
    %26 = vector.load %arg6[%c0_14, %c0_15, %c0_16] : memref<1x256x128xbf16, #tpu.memory_space<vmem>>, vector<1x256x128xbf16>
    %27 = vector.shape_cast %26 : vector<1x256x128xbf16> to vector<256x128xbf16>
    %cst_17 = arith.constant dense<0.000000e+00> : vector<128x128xf32>
    %28 = tpu.matmul %25, %27, %cst_17 {dimension_numbers = #tpu.dot_dimension_numbers<[1], [0], [0], [1], [0, 0, 1, 1], [], []>} : vector<128x256xbf16>, vector<256x128xbf16>, vector<128x128xf32> -> vector<128x128xf32>
    %29 = arith.addf %24, %28 : vector<128x128xf32>
    %c0_18 = arith.constant 0 : index
    %c0_19 = arith.constant 0 : index
    %30 = vector.load %arg9[%c0_18, %c0_19] : memref<128x128xf32, #tpu.memory_space<vmem>>, vector<128x128xf32>
    tpu.vector_store %arg9[%c0_18, %c0_19], %29 {strides = array<i32>} : memref<128x128xf32, #tpu.memory_space<vmem>>, vector<128x128xf32>,
    %c0_i32_20 = arith.constant 0 : i32
    %31 = arith.cmpi eq, %arg1, %c0_i32_20 : i32
    %32 = arith.extui %31 : i1 to i32
    %c0_i32_21 = arith.constant 0 : i32
    %33 = arith.cmpi ne, %32, %c0_i32_21 : i32
    scf.if %33 {
      %c0_22 = arith.constant 0 : index
      %c0_23 = arith.constant 0 : index
      %34 = vector.load %arg9[%c0_22, %c0_23] : memref<128x128xf32, #tpu.memory_space<vmem>>, vector<128x128xf32>
      %c0_24 = arith.constant 0 : index
      %c0_25 = arith.constant 0 : index
      %c0_26 = arith.constant 0 : index
      %35 = vector.load %arg7[%c0_24, %c0_25, %c0_26] : memref<1x1x128xf32, #tpu.memory_space<vmem>>, vector<1x1x128xf32>
      %36 = vector.shape_cast %35 : vector<1x1x128xf32> to vector<1x128xf32>
      %37 = vector.broadcast %36 : vector<1x128xf32> to vector<128x128xf32>
      %38 = arith.addf %34, %37 : vector<128x128xf32>
      %c0_27 = arith.constant 0 : index
      %c0_28 = arith.constant 0 : index
      %39 = vector.load %arg8[%c0_27, %c0_28] : memref<128x128xf32, #tpu.memory_space<vmem>>, vector<128x128xf32>
      tpu.vector_store %arg8[%c0_27, %c0_28], %38 {strides = array<i32>} : memref<128x128xf32, #tpu.memory_space<vmem>>, vector<128x128xf32>,
    } else {
    }
    return
  }
  func.func @transform_0(%arg0: i32, %arg1: i32, %arg2: memref<2xi32, #tpu.memory_space<smem>>) -> (i32, i32) {
    %c0_i32 = arith.constant 0 : i32
    %c0_i32_0 = arith.constant 0 : i32
    return %arg0, %c0_i32 : i32, i32
  }
  func.func @transform_1(%arg0: i32, %arg1: i32, %arg2: memref<2xi32, #tpu.memory_space<smem>>) -> (i32, i32, i32) {
    %0 = arith.index_cast %arg0 : i32 to index
    %1 = memref.load %arg2[%0] : memref<2xi32, #tpu.memory_space<smem>>
    %c0_i32 = arith.constant 0 : i32
    %c0_i32_0 = arith.constant 0 : i32
    return %1, %c0_i32, %arg1 : i32, i32, i32
  }
  func.func @transform_2(%arg0: i32, %arg1: i32, %arg2: memref<2xi32, #tpu.memory_space<smem>>) -> (i32, i32, i32) {
    %0 = arith.index_cast %arg0 : i32 to index
    %1 = memref.load %arg2[%0] : memref<2xi32, #tpu.memory_space<smem>>
    %c0_i32 = arith.constant 0 : i32
    %c0_i32_0 = arith.constant 0 : i32
    return %1, %c0_i32, %arg1 : i32, i32, i32
  }
  func.func @transform_3(%arg0: i32, %arg1: i32, %arg2: memref<2xi32, #tpu.memory_space<smem>>) -> (i32, i32, i32) {
    %0 = arith.index_cast %arg0 : i32 to index
    %1 = memref.load %arg2[%0] : memref<2xi32, #tpu.memory_space<smem>>
    %c0_i32 = arith.constant 0 : i32
    %c0_i32_0 = arith.constant 0 : i32
    return %1, %arg1, %c0_i32 : i32, i32, i32
  }
  func.func @transform_4(%arg0: i32, %arg1: i32, %arg2: memref<2xi32, #tpu.memory_space<smem>>) -> (i32, i32, i32) {
    %0 = arith.index_cast %arg0 : i32 to index
    %1 = memref.load %arg2[%0] : memref<2xi32, #tpu.memory_space<smem>>
    %c0_i32 = arith.constant 0 : i32
    %c0_i32_0 = arith.constant 0 : i32
    %c0_i32_1 = arith.constant 0 : i32
    return %1, %c0_i32, %c0_i32_0 : i32, i32, i32
  }
  func.func @transform_5(%arg0: i32, %arg1: i32, %arg2: memref<2xi32, #tpu.memory_space<smem>>) -> (i32, i32) {
    %c0_i32 = arith.constant 0 : i32
    %c0_i32_0 = arith.constant 0 : i32
    return %arg0, %c0_i32 : i32, i32
  }
}

</mosaic_0001>

<llo_original>
// kernel: tpu_custom_call.1
$region0: #{tpu_custom_call.1}
  #allocation0 [shape = 'u32[]', space=smem, size = 0x4, offset = 0x4, fixed_abs, tag = 'smem constant byte address 0x4 - core index']
  #allocation1 [shape = 'u32[144,128]{1,0:T(1,128)}', space=vmem, size = 0x12000, scoped, tag = 'internal scratch']
  #allocation2 [shape = 'f32[128,128]{1,0:T(8,128)}', space=vmem, size = 0x10000, scoped, tag = 'scratch operand']
  #allocation3 [shape = 's32[1]{0}', space=sflag, size = 0x4, scoped, tag = 'scoped memory for tpu_custom_call.1']
  #allocation4 [shape = 'u8[512]{0}', space=smem, size = 0x200, scoped, tag = 'prefetched SMEM operand 0']
  %s0 = inlined_call_operand.hbm [shape: s32[2], index: 0, kind: input, shape index: {}]
  %s1 = inlined_call_operand.hbm [shape: bf16[256,128], index: 1, kind: input, shape index: {}]
  %s2 = inlined_call_operand.hbm [shape: bf16[2,128,256], index: 2, kind: input, shape index: {}]
  %s3 = inlined_call_operand.vmem [shape: f32[2,1,256], index: 3, kind: input, shape index: {}]
  %s4 = inlined_call_operand.hbm [shape: bf16[2,256,128], index: 4, kind: input, shape index: {}]
  %s5 = inlined_call_operand.vmem [shape: f32[2,1,128], index: 5, kind: input, shape index: {}]
  %s6 = inlined_call_operand.hbm [shape: f32[256,128], index: 6, kind: output, shape index: {}]
  %s7 = sld [smem:[#allocation0]]
  $region73: #{tpu_custom_call.1} parent=0
    _
  %s9 = ssub.s32 1, %s7
  %s10 = scalar_select 0, %s9, %s7
  %12 = dma.hbm_to_smem %s0, 16, [#allocation4], [#allocation3]
  %13 = dma.done [#allocation3], 16
  %14 = sfence
  $region1: #{tpu_custom_call.1} parent=0
    #allocation5 [shape = 'u8[65536]{0}', space=vmem, size = 0x10000, scoped, tag = 'input window, operand 1']
    #allocation6 [shape = 's32[2]{0}', space=sflag, size = 0x8, scoped, tag = 'scoped memory for tpu_custom_call.1']
    #allocation7 [shape = 's32[2]{0}', space=sflag, size = 0x8, scoped, tag = 'scoped memory for tpu_custom_call.1']
    #allocation8 [shape = 'u8[131072]{0}', space=vmem, size = 0x20000, scoped, tag = 'input window, operand 2']
    #allocation9 [shape = 's32[2]{0}', space=sflag, size = 0x8, scoped, tag = 'scoped memory for tpu_custom_call.1']
    #allocation10 [shape = 'u8[131072]{0}', space=vmem, size = 0x20000, scoped, tag = 'input window, operand 4']
    #allocation11 [shape = 'u8[131072]{0}', space=vmem, size = 0x20000, scoped, tag = 'output window, operand 0']
    %15 = vsyncpa [#allocation6], 0
    %s16 = scalar_lea.sflag [#allocation6], 1
    %17 = vsyncpa %s16, 0
    %18 = vsyncpa [#allocation9], 0
    %s19 = scalar_lea.sflag [#allocation9], 1
    %20 = vsyncpa %s19, 0
    %21 = vsyncpa [#allocation7], 0
    %s22 = scalar_lea.sflag [#allocation7], 1
    %23 = vsyncpa %s22, 0
    loop: start=0, step=1, limit=4
    $region2: #{tpu_custom_call.1} parent=1 // loop_pre_header
      _
    $region3: #{tpu_custom_call.1} parent=1 // loop_header
      %s25 = sphi 0, %s29
      %p26 = scmp.ge.s32.totalorder %s25, 4
      %s32 = sphi 0, %s44
      %s33 = sphi 0, %s40
      %s34 = sphi 0, %s32
      %s35 = sphi 0, %s33
      %s36 = sphi 0, %s34
      %s37 = sphi 0, %s35
      %s47 = sphi 0, %s49
      %s50 = sphi 0, %s47
      %s51 = sphi 0, %s50
      %s67 = sphi 0, %s51
      %s77 = sphi 0, %s79
      %s80 = sphi 0, %s77
      %s81 = sphi 0, %s80
      %s97 = sphi 0, %s81
      %s107 = sphi 0, %s109
      %s110 = sphi 0, %s107
      %s111 = sphi 0, %s110
      %s127 = sphi 0, %s111
      %s137 = sphi 0, %s139
      %s140 = sphi 0, %s137
      %s141 = sphi 0, %s140
      %s157 = sphi 0, %s141
      %s165 = sphi 0, %s167
      %s168 = sphi 0, %s165
      %s169 = sphi 0, %s168
      %s185 = sphi 0, %s169
      %s191 = sphi 0, %s193
      %s194 = sphi 0, %s191
      %s195 = sphi 0, %s194
      %s211 = sphi 0, %s195
    $region4: #{tpu_custom_call.1} parent=1 // loop_header_branch
      %28 = sbr.rel (%p26) target = $region8
    $region5: #{tpu_custom_call.1} parent=1 // loop_body
      %s30 = ssub.s32 %s25, 1
      %s31 = ssub.s32 %s25, 2
      %s38 = sadd.s32 1, %s33
      %p39 = scmp.ge.s32.totalorder %s38, 1
      %s40 = scalar_select %p39, 0, %s38
      %s41 = sadd.s32 1, %s32
      %s42 = scalar_select %p39, %s41, %s32
      %p43 = scmp.ge.s32.totalorder %s42, 2
      %s44 = scalar_select %p43, 0, %s42
      %s45 = ssub.s32 %s32, %s44
      %p46 = scmp.eq.s32.totalorder %s45, 0
      %s48 = sadd.s32 %s47, 1
      %s49 = scalar_select %p46, %s47, %s48
      %p52 = pneg %p46
      %p53 = scmp.eq.s32.totalorder %s25, 1
      %p54 = por %p52, %p53
      %p55 = scmp.ne.s32.totalorder %s47, %s50
      %p56 = scmp.eq.s32.totalorder %s25, 0
      %p57 = por %p55, %p56
      %p58 = scmp.ne.s32.totalorder %s47, %s50
      %p59 = scmp.eq.s32.totalorder %s30, 1
      %p60 = por %p58, %p59
      %p61 = scmp.ne.s32.totalorder %s50, %s51
      %p62 = scmp.eq.s32.totalorder %s30, 0
      %p63 = por %p61, %p62
      %p64 = scmp.ne.s32.totalorder %s50, %s51
      %p65 = scmp.eq.s32.totalorder %s31, 1
      %p66 = por %p64, %p65
      %p68 = scmp.ne.s32.totalorder %s51, %s67
      %p69 = scmp.eq.s32.totalorder %s31, 0
      %p70 = por %p68, %p69
      %s71 = sld [smem:[#allocation4 + %s32]]
      %s72 = sld [smem:[#allocation4 + %s44]]
      %s73 = ssub.s32 %s71, %s72
      %s74 = ssub.s32 %s33, %s40
      %s75 = sor.u32 %s73, %s74
      %p76 = scmp.eq.s32.totalorder %s75, 0
      %s78 = sadd.s32 %s77, 1
      %s79 = scalar_select %p76, %s77, %s78
      %p82 = pneg %p76
      %p83 = scmp.eq.s32.totalorder %s25, 1
      %p84 = por %p82, %p83
      %p85 = scmp.ne.s32.totalorder %s77, %s80
      %p86 = scmp.eq.s32.totalorder %s25, 0
      %p87 = por %p85, %p86
      %p88 = scmp.ne.s32.totalorder %s77, %s80
      %p89 = scmp.eq.s32.totalorder %s30, 1
      %p90 = por %p88, %p89
      %p91 = scmp.ne.s32.totalorder %s80, %s81
      %p92 = scmp.eq.s32.totalorder %s30, 0
      %p93 = por %p91, %p92
      %p94 = scmp.ne.s32.totalorder %s80, %s81
      %p95 = scmp.eq.s32.totalorder %s31, 1
      %p96 = por %p94, %p95
      %p98 = scmp.ne.s32.totalorder %s81, %s97
      %p99 = scmp.eq.s32.totalorder %s31, 0
      %p100 = por %p98, %p99
      %s101 = sld [smem:[#allocation4 + %s32]]
      %s102 = sld [smem:[#allocation4 + %s44]]
      %s103 = ssub.s32 %s101, %s102
      %s104 = ssub.s32 %s33, %s40
      %s105 = sor.u32 %s103, %s104
      %p106 = scmp.eq.s32.totalorder %s105, 0
      %s108 = sadd.s32 %s107, 1
      %s109 = scalar_select %p106, %s107, %s108
      %p112 = pneg %p106
      %p113 = scmp.eq.s32.totalorder %s25, 1
      %p114 = por %p112, %p113
      %p115 = scmp.ne.s32.totalorder %s107, %s110
      %p116 = scmp.eq.s32.totalorder %s25, 0
      %p117 = por %p115, %p116
      %p118 = scmp.ne.s32.totalorder %s107, %s110
      %p119 = scmp.eq.s32.totalorder %s30, 1
      %p120 = por %p118, %p119
      %p121 = scmp.ne.s32.totalorder %s110, %s111
      %p122 = scmp.eq.s32.totalorder %s30, 0
      %p123 = por %p121, %p122
      %p124 = scmp.ne.s32.totalorder %s110, %s111
      %p125 = scmp.eq.s32.totalorder %s31, 1
      %p126 = por %p124, %p125
      %p128 = scmp.ne.s32.totalorder %s111, %s127
      %p129 = scmp.eq.s32.totalorder %s31, 0
      %p130 = por %p128, %p129
      %s131 = sld [smem:[#allocation4 + %s32]]
      %s132 = sld [smem:[#allocation4 + %s44]]
      %s133 = ssub.s32 %s131, %s132
      %s134 = ssub.s32 %s33, %s40
      %s135 = sor.u32 %s133, %s134
      %p136 = scmp.eq.s32.totalorder %s135, 0
      %s138 = sadd.s32 %s137, 1
      %s139 = scalar_select %p136, %s137, %s138
      %p142 = pneg %p136
      %p143 = scmp.eq.s32.totalorder %s25, 1
      %p144 = por %p142, %p143
      %p145 = scmp.ne.s32.totalorder %s137, %s140
      %p146 = scmp.eq.s32.totalorder %s25, 0
      %p147 = por %p145, %p146
      %p148 = scmp.ne.s32.totalorder %s137, %s140
      %p149 = scmp.eq.s32.totalorder %s30, 1
      %p150 = por %p148, %p149
      %p151 = scmp.ne.s32.totalorder %s140, %s141
      %p152 = scmp.eq.s32.totalorder %s30, 0
      %p153 = por %p151, %p152
      %p154 = scmp.ne.s32.totalorder %s140, %s141
      %p155 = scmp.eq.s32.totalorder %s31, 1
      %p156 = por %p154, %p155
      %p158 = scmp.ne.s32.totalorder %s141, %s157
      %p159 = scmp.eq.s32.totalorder %s31, 0
      %p160 = por %p158, %p159
      %s161 = sld [smem:[#allocation4 + %s32]]
      %s162 = sld [smem:[#allocation4 + %s44]]
      %s163 = ssub.s32 %s161, %s162
      %p164 = scmp.eq.s32.totalorder %s163, 0
      %s166 = sadd.s32 %s165, 1
      %s167 = scalar_select %p164, %s165, %s166
      %p170 = pneg %p164
      %p171 = scmp.eq.s32.totalorder %s25, 1
      %p172 = por %p170, %p171
      %p173 = scmp.ne.s32.totalorder %s165, %s168
      %p174 = scmp.eq.s32.totalorder %s25, 0
      %p175 = por %p173, %p174
      %p176 = scmp.ne.s32.totalorder %s165, %s168
      %p177 = scmp.eq.s32.totalorder %s30, 1
      %p178 = por %p176, %p177
      %p179 = scmp.ne.s32.totalorder %s168, %s169
      %p180 = scmp.eq.s32.totalorder %s30, 0
      %p181 = por %p179, %p180
      %p182 = scmp.ne.s32.totalorder %s168, %s169
      %p183 = scmp.eq.s32.totalorder %s31, 1
      %p184 = por %p182, %p183
      %p186 = scmp.ne.s32.totalorder %s169, %s185
      %p187 = scmp.eq.s32.totalorder %s31, 0
      %p188 = por %p186, %p187
      %s189 = ssub.s32 %s32, %s44
      %p190 = scmp.eq.s32.totalorder %s189, 0
      %s192 = sadd.s32 %s191, 1
      %s193 = scalar_select %p190, %s191, %s192
      %p196 = pneg %p190
      %p197 = scmp.eq.s32.totalorder %s25, 1
      %p198 = por %p196, %p197
      %p199 = scmp.ne.s32.totalorder %s191, %s194
      %p200 = scmp.eq.s32.totalorder %s25, 0
      %p201 = por %p199, %p200
      %p202 = scmp.ne.s32.totalorder %s191, %s194
      %p203 = scmp.eq.s32.totalorder %s30, 1
      %p204 = por %p202, %p203
      %p205 = scmp.ne.s32.totalorder %s194, %s195
      %p206 = scmp.eq.s32.totalorder %s30, 0
      %p207 = por %p205, %p206
      %p208 = scmp.ne.s32.totalorder %s194, %s195
      %p209 = scmp.eq.s32.totalorder %s31, 1
      %p210 = por %p208, %p209
      %p212 = scmp.ne.s32.totalorder %s195, %s211
      %p213 = scmp.eq.s32.totalorder %s31, 0
      %p214 = por %p212, %p213
      %p215 = scmp.le.s32.totalorder 1, %s25
      %p216 = scmp.lt.s32.totalorder %s25, 3
      %p217 = pnand %p215, %p216
      %p218 = pneg %p217
      // Predicated region
      $region9: #{tpu_custom_call.1} parent=5 // pred_check
        _
      $region10: #{tpu_custom_call.1} parent=5 // pred_check_branch
        %220 = sbr.rel (%p217) target = $region12
      $region11: #{tpu_custom_call.1} parent=5 // pred_region
        %s221 = ssub.s32 %s25, 1
      $region12: #{tpu_custom_call.1} parent=5 // pred_fallthru
        _
      %p222 = scmp.lt.s32.totalorder %s25, 2
      // Predicated region
      $region13: #{tpu_custom_call.1} parent=5 // pred_check
        %p223 = pneg %p222
      $region14: #{tpu_custom_call.1} parent=5 // pred_check_branch
        %225 = sbr.rel (%p223) target = $region16
      $region15: #{tpu_custom_call.1} parent=5 // pred_region
        // Predicated region
        $region17: #{tpu_custom_call.1} parent=15 // pred_check
          %p226 = pneg %p57
        $region18: #{tpu_custom_call.1} parent=15 // pred_check_branch
          %228 = sbr.rel (%p226) target = $region20
        $region19: #{tpu_custom_call.1} parent=15 // pred_region
          %s229 = sand.u32 %s47, 1
          %s230 = scalar_lea.sflag [#allocation6], %s229
          %s231 = sand.u32 %s47, 1
          %s232 = smul.addr %s231, 64
          %s233 = scalar_lea.vmem [#allocation5], %s232
          %s234 = smul.u32 16, %s32
          %s236 = ssub.s32 1024, 1024
          %237 = vsyncadd %s230, %s236
          %s238 = smul.addr %s234, 64
          %s239 = scalar_lea.hbm %s1, %s238
          %s240 = sshll.u32 %s233, 4
          %s241 = int_to_ptr.vmem [resolvable:$true] %s240
          %246 = dma.hbm_to_vmem [thread:$0]  %s239, 1024, %s241, %s230, 64, 64, 4
        $region20: #{tpu_custom_call.1} parent=15 // pred_fallthru
          _
        // Predicated region
        $region21: #{tpu_custom_call.1} parent=15 // pred_check
          %p247 = pneg %p87
        $region22: #{tpu_custom_call.1} parent=15 // pred_check_branch
          %249 = sbr.rel (%p247) target = $region24
        $region23: #{tpu_custom_call.1} parent=15 // pred_region
          %s250 = sand.u32 %s25, 1
          %s251 = scalar_lea.sflag [#allocation9], %s250
          %s252 = sand.u32 %s77, 1
          %s253 = smul.addr %s252, 128
          %s254 = scalar_lea.vmem [#allocation8], %s253
          %s255 = sld [smem:[#allocation4 + %s32]]
          %s256 = smul.u32 2, %s33
          %s258 = ssub.s32 2048, 2048
          %259 = vsyncadd %s251, %s258
          %s260 = smul.addr %s255, 32
          %s261 = sadd.s32 %s256, %s260
          %s262 = smul.addr %s261, 64
          %s263 = scalar_lea.hbm %s2, %s262
          %s264 = sshll.u32 %s254, 4
          %s265 = int_to_ptr.vmem [resolvable:$true] %s264
          %270 = dma.hbm_to_vmem [thread:$0]  %s263, 2048, %s265, %s251, 128, 128, 8
        $region24: #{tpu_custom_call.1} parent=15 // pred_fallthru
          _
        // Predicated region
        $region25: #{tpu_custom_call.1} parent=15 // pred_check
          %p271 = pneg %p117
        $region26: #{tpu_custom_call.1} parent=15 // pred_check_branch
          %273 = sbr.rel (%p271) target = $region28
        $region27: #{tpu_custom_call.1} parent=15 // pred_region
          %s274 = sld [smem:[#allocation4 + %s32]]
          %s275 = smul.u32 2, %s33
          %p276 = scmp.lt.s32.totalorder %s274, 1
          %s277 = scalar_select %p276, %s274, 1
          %p278 = scmp.lt.s32.totalorder %s275, 1
          %s279 = scalar_select %p278, %s275, 1
          %s280 = smul.addr %s277, 2
          %s281 = sadd.s32 %s279, %s280
          %s282 = scalar_lea.vmem %s3, %s281
          %s283 = sld [smem:[#allocation4 + %s32]]
          %s284 = smul.u32 2, %s33
        $region28: #{tpu_custom_call.1} parent=15 // pred_fallthru
          _
        // Predicated region
        $region29: #{tpu_custom_call.1} parent=15 // pred_check
          %p285 = pneg %p147
        $region30: #{tpu_custom_call.1} parent=15 // pred_check_branch
          %287 = sbr.rel (%p285) target = $region32
        $region31: #{tpu_custom_call.1} parent=15 // pred_region
          %s288 = sand.u32 %s25, 1
          %s289 = scalar_lea.sflag [#allocation9], %s288
          %s290 = sand.u32 %s137, 1
          %s291 = smul.addr %s290, 128
          %s292 = scalar_lea.vmem [#allocation10], %s291
          %s293 = sld [smem:[#allocation4 + %s32]]
          %s294 = smul.u32 32, %s33
          %s296 = ssub.s32 2048, 2048
          %297 = vsyncadd %s289, %s296
          %s298 = smul.addr %s293, 32
          %s299 = sadd.s32 %s294, %s298
          %s300 = smul.addr %s299, 64
          %s301 = scalar_lea.hbm %s4, %s300
          %s302 = sshll.u32 %s292, 4
          %s303 = int_to_ptr.vmem [resolvable:$true] %s302
          %308 = dma.hbm_to_vmem [thread:$0]  %s301, 2048, %s303, %s289, 64, 64, 4
        $region32: #{tpu_custom_call.1} parent=15 // pred_fallthru
          _
        // Predicated region
        $region33: #{tpu_custom_call.1} parent=15 // pred_check
          %p309 = pneg %p175
        $region34: #{tpu_custom_call.1} parent=15 // pred_check_branch
          %311 = sbr.rel (%p309) target = $region36
        $region35: #{tpu_custom_call.1} parent=15 // pred_region
          %s312 = sld [smem:[#allocation4 + %s32]]
          %p313 = scmp.lt.s32.totalorder %s312, 1
          %s314 = scalar_select %p313, %s312, 1
          %s315 = scalar_lea.vmem %s5, %s314
          %s316 = sld [smem:[#allocation4 + %s32]]
        $region36: #{tpu_custom_call.1} parent=15 // pred_fallthru
          _
      $region16: #{tpu_custom_call.1} parent=5 // pred_fallthru
        _
      %p317 = scmp.le.s32.totalorder 1, %s25
      %p318 = scmp.lt.s32.totalorder %s25, 3
      %p319 = pnand %p317, %p318
      %p320 = pneg %p319
      // Predicated region
      $region37: #{tpu_custom_call.1} parent=5 // pred_check
        _
      $region38: #{tpu_custom_call.1} parent=5 // pred_check_branch
        %322 = sbr.rel (%p319) target = $region40
      $region39: #{tpu_custom_call.1} parent=5 // pred_region
        %s323 = ssub.s32 %s25, 1
        %s324 = sand.u32 %s50, 1
        %s325 = scalar_lea.sflag [#allocation6], %s324
        %s326 = sand.u32 %s50, 1
        %s327 = smul.addr %s326, 64
        %s328 = scalar_lea.vmem [#allocation5], %s327
        // Predicated region
        $region41: #{tpu_custom_call.1} parent=39 // pred_check
          %p329 = pneg %p63
        $region42: #{tpu_custom_call.1} parent=39 // pred_check_branch
          %331 = sbr.rel (%p329) target = $region44
        $region43: #{tpu_custom_call.1} parent=39 // pred_region
          %332 = dma.done %s325, 1024
        $region44: #{tpu_custom_call.1} parent=39 // pred_fallthru
          _
        %s333 = sand.u32 %s30, 1
        %s334 = scalar_lea.sflag [#allocation9], %s333
        %s335 = sand.u32 %s80, 1
        %s336 = smul.addr %s335, 128
        %s337 = scalar_lea.vmem [#allocation8], %s336
        // Predicated region
        $region45: #{tpu_custom_call.1} parent=39 // pred_check
          %p338 = pneg %p93
        $region46: #{tpu_custom_call.1} parent=39 // pred_check_branch
          %340 = sbr.rel (%p338) target = $region48
        $region47: #{tpu_custom_call.1} parent=39 // pred_region
          %341 = dma.done %s334, 2048
        $region48: #{tpu_custom_call.1} parent=39 // pred_fallthru
          _
        %s342 = sand.u32 %s30, 1
        %s343 = scalar_lea.sflag [#allocation9], %s342
        %s344 = sand.u32 %s140, 1
        %s345 = smul.addr %s344, 128
        %s346 = scalar_lea.vmem [#allocation10], %s345
        // Predicated region
        $region49: #{tpu_custom_call.1} parent=39 // pred_check
          %p347 = pneg %p153
        $region50: #{tpu_custom_call.1} parent=39 // pred_check_branch
          %349 = sbr.rel (%p347) target = $region52
        $region51: #{tpu_custom_call.1} parent=39 // pred_region
          %350 = dma.done %s343, 2048
        $region52: #{tpu_custom_call.1} parent=39 // pred_fallthru
          _
        %s351 = sand.u32 %s50, 1
        %s352 = scalar_lea.sflag [#allocation6], %s351
        %s353 = sand.u32 %s50, 1
        %s354 = smul.addr %s353, 64
        %s355 = scalar_lea.vmem [#allocation5], %s354
        %p356 = pneg %p63
        %p357 = pneg %p60
        %s358 = sand.u32 %s30, 1
        %s359 = scalar_lea.sflag [#allocation9], %s358
        %s360 = sand.u32 %s80, 1
        %s361 = smul.addr %s360, 128
        %s362 = scalar_lea.vmem [#allocation8], %s361
        %p363 = pneg %p93
        %p364 = pneg %p90
        %s365 = sld [smem:[#allocation4 + %s34]]
        %s366 = smul.u32 2, %s35
        %p367 = scmp.lt.s32.totalorder %s365, 1
        %s368 = scalar_select %p367, %s365, 1
        %p369 = scmp.lt.s32.totalorder %s366, 1
        %s370 = scalar_select %p369, %s366, 1
        %s371 = smul.addr %s368, 2
        %s372 = sadd.s32 %s370, %s371
        %s373 = scalar_lea.vmem %s3, %s372
        %p374 = pneg %p123
        %p375 = pneg %p120
        %s376 = sand.u32 %s30, 1
        %s377 = scalar_lea.sflag [#allocation9], %s376
        %s378 = sand.u32 %s140, 1
        %s379 = smul.addr %s378, 128
        %s380 = scalar_lea.vmem [#allocation10], %s379
        %p381 = pneg %p153
        %p382 = pneg %p150
        %s383 = sld [smem:[#allocation4 + %s34]]
        %p384 = scmp.lt.s32.totalorder %s383, 1
        %s385 = scalar_select %p384, %s383, 1
        %s386 = scalar_lea.vmem %s5, %s385
        %p387 = pneg %p181
        %p388 = pneg %p178
        %p389 = pneg %p207
        %p390 = pneg %p204
        %s391 = sand.u32 %s194, 1
        %s392 = scalar_lea.sflag [#allocation7], %s391
        %s393 = sand.u32 %s194, 1
        %s394 = smul.addr %s393, 128
        %s395 = scalar_lea.vmem [#allocation11], %s394
        %s396 = smul.u32 16, %s34
        %s397 = sld [smem:[#allocation4 + %s34]]
        %s398 = smul.u32 2, %s35
        %s399 = sld [smem:[#allocation4 + %s34]]
        %s400 = smul.u32 2, %s35
        %p401 = scmp.lt.s32.totalorder %s399, 1
        %s402 = scalar_select %p401, %s399, 1
        %p403 = scmp.lt.s32.totalorder %s400, 1
        %s404 = scalar_select %p403, %s400, 1
        %s405 = smul.addr %s402, 2
        %s406 = sadd.s32 %s404, %s405
        %s407 = scalar_lea.vmem %s3, %s406
        %s408 = sld [smem:[#allocation4 + %s34]]
        %s409 = smul.u32 2, %s35
        %s410 = sld [smem:[#allocation4 + %s34]]
        %s411 = smul.u32 32, %s35
        %s412 = sld [smem:[#allocation4 + %s34]]
        %p413 = scmp.lt.s32.totalorder %s412, 1
        %s414 = scalar_select %p413, %s412, 1
        %s415 = scalar_lea.vmem %s5, %s414
        %s416 = sld [smem:[#allocation4 + %s34]]
        %s417 = smul.u32 16, %s34
        %p419 = scmp.eq.s32.totalorder %s35, 0
        // Predicated region
        $region53: #{tpu_custom_call.1} parent=39 // pred_check
          %p420 = pneg %p419
        $region54: #{tpu_custom_call.1} parent=39 // pred_check_branch
          %422 = sbr.rel (%p420) target = $region56
        $region55: #{tpu_custom_call.1} parent=39 // pred_region
          %423 = vst [vmem:[#allocation2] sm:$0xff] 0.0
          %424 = vst [vmem:[#allocation2 + $0x8] sm:$0xff] 0.0
          %425 = vst [vmem:[#allocation2 + $0x10] sm:$0xff] 0.0
          %426 = vst [vmem:[#allocation2 + $0x18] sm:$0xff] 0.0
          %427 = vst [vmem:[#allocation2 + $0x20] sm:$0xff] 0.0
          %428 = vst [vmem:[#allocation2 + $0x28] sm:$0xff] 0.0
          %429 = vst [vmem:[#allocation2 + $0x30] sm:$0xff] 0.0
          %430 = vst [vmem:[#allocation2 + $0x38] sm:$0xff] 0.0
          %431 = vst [vmem:[#allocation2 + $0x40] sm:$0xff] 0.0
          %432 = vst [vmem:[#allocation2 + $0x48] sm:$0xff] 0.0
          %433 = vst [vmem:[#allocation2 + $0x50] sm:$0xff] 0.0
          %434 = vst [vmem:[#allocation2 + $0x58] sm:$0xff] 0.0
          %435 = vst [vmem:[#allocation2 + $0x60] sm:$0xff] 0.0
          %436 = vst [vmem:[#allocation2 + $0x68] sm:$0xff] 0.0
          %437 = vst [vmem:[#allocation2 + $0x70] sm:$0xff] 0.0
          %438 = vst [vmem:[#allocation2 + $0x78] sm:$0xff] 0.0
        $region56: #{tpu_custom_call.1} parent=39 // pred_fallthru
          _
        %v439 = vld [vmem:[%s328] sm:$0xf]
        %v440 = vld [vmem:[%s328 + $0x4] sm:$0xf]
        %v441 = vld [vmem:[%s328 + $0x8] sm:$0xf]
        %v442 = vld [vmem:[%s328 + $0xc] sm:$0xf]
        %v443 = vld [vmem:[%s328 + $0x10] sm:$0xf]
        %v444 = vld [vmem:[%s328 + $0x14] sm:$0xf]
        %v445 = vld [vmem:[%s328 + $0x18] sm:$0xf]
        %v446 = vld [vmem:[%s328 + $0x1c] sm:$0xf]
        %v447 = vld [vmem:[%s328 + $0x20] sm:$0xf]
        %v448 = vld [vmem:[%s328 + $0x24] sm:$0xf]
        %v449 = vld [vmem:[%s328 + $0x28] sm:$0xf]
        %v450 = vld [vmem:[%s328 + $0x2c] sm:$0xf]
        %v451 = vld [vmem:[%s328 + $0x30] sm:$0xf]
        %v452 = vld [vmem:[%s328 + $0x34] sm:$0xf]
        %v453 = vld [vmem:[%s328 + $0x38] sm:$0xf]
        %v454 = vld [vmem:[%s328 + $0x3c] sm:$0xf]
        %v455 = vld [vmem:[%s337] sm:$0xff]
        %v456 = vld [vmem:[%s337 + $0x8] sm:$0xff]
        %v457 = vld [vmem:[%s337 + $0x10] sm:$0xff]
        %v458 = vld [vmem:[%s337 + $0x18] sm:$0xff]
        %v459 = vld [vmem:[%s337 + $0x20] sm:$0xff]
        %v460 = vld [vmem:[%s337 + $0x28] sm:$0xff]
        %v461 = vld [vmem:[%s337 + $0x30] sm:$0xff]
        %v462 = vld [vmem:[%s337 + $0x38] sm:$0xff]
        %v463 = vld [vmem:[%s337 + $0x40] sm:$0xff]
        %v464 = vld [vmem:[%s337 + $0x48] sm:$0xff]
        %v465 = vld [vmem:[%s337 + $0x50] sm:$0xff]
        %v466 = vld [vmem:[%s337 + $0x58] sm:$0xff]
        %v467 = vld [vmem:[%s337 + $0x60] sm:$0xff]
        %v468 = vld [vmem:[%s337 + $0x68] sm:$0xff]
        %v469 = vld [vmem:[%s337 + $0x70] sm:$0xff]
        %v470 = vld [vmem:[%s337 + $0x78] sm:$0xff]
        %v471 = vld [vmem:[%s407] sm:$0x3]
        %v473 = vlaneseq
        %v474 = vshrl.u32 %v473, 7
        %v475 = vsub.s32 0, %v474
        %v476 = vrot.slane %v471, %v475
        %v477 = vlaneseq
        %v478 = vshrl.u32 %v477, 7
        %v479 = vsub.s32 1, %v478
        %v480 = vrot.slane %v471, %v479
        %v499 = vunpack.c.l.b16 %v439
        %v500 = vunpack.c.l.b16 %v440
        %v501 = vunpack.c.l.b16 %v441
        %v502 = vunpack.c.l.b16 %v442
        %v503 = vunpack.c.l.b16 %v443
        %v504 = vunpack.c.l.b16 %v444
        %v505 = vunpack.c.l.b16 %v445
        %v506 = vunpack.c.l.b16 %v446
        %v507 = vunpack.c.l.b16 %v447
        %v508 = vunpack.c.l.b16 %v448
        %v509 = vunpack.c.l.b16 %v449
        %v510 = vunpack.c.l.b16 %v450
        %v511 = vunpack.c.l.b16 %v451
        %v512 = vunpack.c.l.b16 %v452
        %v513 = vunpack.c.l.b16 %v453
        %v514 = vunpack.c.l.b16 %v454
        %v515 = vpack.c.b16 %v500, %v499
        %v516 = vpack.c.b16 %v502, %v501
        %v517 = vpack.c.b16 %v504, %v503
        %v518 = vpack.c.b16 %v506, %v505
        %v519 = vpack.c.b16 %v508, %v507
        %v520 = vpack.c.b16 %v510, %v509
        %v521 = vpack.c.b16 %v512, %v511
        %v522 = vpack.c.b16 %v514, %v513
        %v547 = vunpack.c.l.b16 %v455
        %v548 = vunpack.c.h.b16 %v455
        %v549 = vunpack.c.l.b16 %v456
        %v550 = vunpack.c.h.b16 %v456
        %v551 = vunpack.c.l.b16 %v457
        %v552 = vunpack.c.h.b16 %v457
        %v553 = vunpack.c.l.b16 %v458
        %v554 = vunpack.c.h.b16 %v458
        %v555 = vunpack.c.l.b16 %v459
        %v556 = vunpack.c.h.b16 %v459
        %v557 = vunpack.c.l.b16 %v460
        %v558 = vunpack.c.h.b16 %v460
        %v559 = vunpack.c.l.b16 %v461
        %v560 = vunpack.c.h.b16 %v461
        %v561 = vunpack.c.l.b16 %v462
        %v562 = vunpack.c.h.b16 %v462
        %v563 = vunpack.c.l.b16 %v463
        %v564 = vunpack.c.h.b16 %v463
        %v565 = vunpack.c.l.b16 %v464
        %v566 = vunpack.c.h.b16 %v464
        %v567 = vunpack.c.l.b16 %v465
        %v568 = vunpack.c.h.b16 %v465
        %v569 = vunpack.c.l.b16 %v466
        %v570 = vunpack.c.h.b16 %v466
        %v571 = vunpack.c.l.b16 %v467
        %v572 = vunpack.c.h.b16 %v467
        %v573 = vunpack.c.l.b16 %v468
        %v574 = vunpack.c.h.b16 %v468
        %v575 = vunpack.c.l.b16 %v469
        %v576 = vunpack.c.h.b16 %v469
        %v577 = vunpack.c.l.b16 %v470
        %v578 = vunpack.c.h.b16 %v470
        %v579 = vpack.c.b16 %v549, %v547
        %v580 = vpack.c.b16 %v550, %v548
        %v581 = vpack.c.b16 %v553, %v551
        %v582 = vpack.c.b16 %v554, %v552
        %v583 = vpack.c.b16 %v557, %v555
        %v584 = vpack.c.b16 %v558, %v556
        %v585 = vpack.c.b16 %v561, %v559
        %v586 = vpack.c.b16 %v562, %v560
        %v587 = vpack.c.b16 %v565, %v563
        %v588 = vpack.c.b16 %v566, %v564
        %v589 = vpack.c.b16 %v569, %v567
        %v590 = vpack.c.b16 %v570, %v568
        %v591 = vpack.c.b16 %v573, %v571
        %v592 = vpack.c.b16 %v574, %v572
        %v593 = vpack.c.b16 %v577, %v575
        %v594 = vpack.c.b16 %v578, %v576
        %611 = vmatprep.subr.bf16.mxu0 %v594
        %612 = vmatpush1.bf16.msra.mxu0 %v593
        %613 = vmatprep.subr.bf16.mxu0 %v592
        %614 = vmatpush1.bf16.msra.mxu0 %v591
        %615 = vmatprep.subr.bf16.mxu0 %v590
        %616 = vmatpush1.bf16.msra.mxu0 %v589
        %617 = vmatprep.subr.bf16.mxu0 %v588
        %618 = vmatpush1.bf16.msra.mxu0 %v587
        %619 = vmatprep.subr.bf16.mxu0 %v586
        %620 = vmatpush1.bf16.msra.mxu0 %v585
        %621 = vmatprep.subr.bf16.mxu0 %v584
        %622 = vmatpush1.bf16.msra.mxu0 %v583
        %623 = vmatprep.subr.bf16.mxu0 %v582
        %624 = vmatpush1.bf16.msra.mxu0 %v581
        %625 = vmatprep.subr.bf16.mxu0 %v580
        %626 = vmatpush1.bf16.msra.mxu0 %v579
        %627 = vmatprep.subr.bf16.mxu0 0
        %628 = vmatpush2.bf16.msra.mxu0 0
        %629 = vmatprep.subr.bf16.mxu0 0
        %630 = vmatpush2.bf16.msra.mxu0 0
        %631 = vmatprep.subr.bf16.mxu0 0
        %632 = vmatpush2.bf16.msra.mxu0 0
        %633 = vmatprep.subr.bf16.mxu0 0
        %634 = vmatpush2.bf16.msra.mxu0 0
        %635 = vmatprep.subr.bf16.mxu0 0
        %636 = vmatpush2.bf16.msra.mxu0 0
        %637 = vmatprep.subr.bf16.mxu0 0
        %638 = vmatpush2.bf16.msra.mxu0 0
        %639 = vmatprep.subr.bf16.mxu0 0
        %640 = vmatpush2.bf16.msra.mxu0 0
        %641 = vmatprep.subr.bf16.mxu0 0
        %642 = vmatpush2.bf16.msra.mxu0 0
        %643 = vmatprep.mubr.bf16.mxu0 0
        %644 = vmatmul.mubr.bf16.gmra.mxu0 %v515
        %v645 = vpop.f32.mrf.mxu0
        %v646 = vadd.f32 %v476, %v645
        %v647 = vpop.f32.mrf.mxu0
        %v648 = vadd.f32 %v480, %v647
        %v649 = vpop.f32.mrf.mxu0
        %v650 = vadd.f32 %v476, %v649
        %v651 = vpop.f32.mrf.mxu0
        %v652 = vadd.f32 %v480, %v651
        %653 = vmatprep.mubr.bf16.mxu0 0
        %654 = vmatmul.mubr.bf16.gmra.mxu0 %v516
        %v655 = vpop.f32.mrf.mxu0
        %v656 = vadd.f32 %v476, %v655
        %v657 = vpop.f32.mrf.mxu0
        %v658 = vadd.f32 %v480, %v657
        %v659 = vpop.f32.mrf.mxu0
        %v660 = vadd.f32 %v476, %v659
        %v661 = vpop.f32.mrf.mxu0
        %v662 = vadd.f32 %v480, %v661
        %663 = vmatprep.mubr.bf16.mxu0 0
        %664 = vmatmul.mubr.bf16.gmra.mxu0 %v517
        %v665 = vpop.f32.mrf.mxu0
        %v666 = vadd.f32 %v476, %v665
        %v667 = vpop.f32.mrf.mxu0
        %v668 = vadd.f32 %v480, %v667
        %v669 = vpop.f32.mrf.mxu0
        %v670 = vadd.f32 %v476, %v669
        %v671 = vpop.f32.mrf.mxu0
        %v672 = vadd.f32 %v480, %v671
        %673 = vmatprep.mubr.bf16.mxu0 0
        %674 = vmatmul.mubr.bf16.gmra.mxu0 %v518
        %v675 = vpop.f32.mrf.mxu0
        %v676 = vadd.f32 %v476, %v675
        %v677 = vpop.f32.mrf.mxu0
        %v678 = vadd.f32 %v480, %v677
        %v679 = vpop.f32.mrf.mxu0
        %v680 = vadd.f32 %v476, %v679
        %v681 = vpop.f32.mrf.mxu0
        %v682 = vadd.f32 %v480, %v681
        %683 = vmatprep.mubr.bf16.mxu0 0
        %684 = vmatmul.mubr.bf16.gmra.mxu0 %v519
        %v685 = vpop.f32.mrf.mxu0
        %v686 = vadd.f32 %v476, %v685
        %v687 = vpop.f32.mrf.mxu0
        %v688 = vadd.f32 %v480, %v687
        %v689 = vpop.f32.mrf.mxu0
        %v690 = vadd.f32 %v476, %v689
        %v691 = vpop.f32.mrf.mxu0
        %v692 = vadd.f32 %v480, %v691
        %693 = vmatprep.mubr.bf16.mxu0 0
        %694 = vmatmul.mubr.bf16.gmra.mxu0 %v520
        %v695 = vpop.f32.mrf.mxu0
        %v696 = vadd.f32 %v476, %v695
        %v697 = vpop.f32.mrf.mxu0
        %v698 = vadd.f32 %v480, %v697
        %v699 = vpop.f32.mrf.mxu0
        %v700 = vadd.f32 %v476, %v699
        %v701 = vpop.f32.mrf.mxu0
        %v702 = vadd.f32 %v480, %v701
        %703 = vmatprep.mubr.bf16.mxu0 0
        %704 = vmatmul.mubr.bf16.gmra.mxu0 %v521
        %v705 = vpop.f32.mrf.mxu0
        %v706 = vadd.f32 %v476, %v705
        %v707 = vpop.f32.mrf.mxu0
        %v708 = vadd.f32 %v480, %v707
        %v709 = vpop.f32.mrf.mxu0
        %v710 = vadd.f32 %v476, %v709
        %v711 = vpop.f32.mrf.mxu0
        %v712 = vadd.f32 %v480, %v711
        %713 = vmatprep.mubr.bf16.mxu0 0
        %714 = vmatmul.mubr.bf16.gmra.mxu0 %v522
        %v715 = vpop.f32.mrf.mxu0
        %v716 = vadd.f32 %v476, %v715
        %v717 = vpop.f32.mrf.mxu0
        %v718 = vadd.f32 %v480, %v717
        %v719 = vpop.f32.mrf.mxu0
        %v720 = vadd.f32 %v476, %v719
        %v721 = vpop.f32.mrf.mxu0
        %v722 = vadd.f32 %v480, %v721
        %723 = vdwg.mxu0
        %v724 = vmul.f32 %v646, %v646
        %v725 = vmul.f32 %v648, %v648
        %v726 = vmul.f32 %v650, %v650
        %v727 = vmul.f32 %v652, %v652
        %v728 = vmul.f32 %v656, %v656
        %v729 = vmul.f32 %v658, %v658
        %v730 = vmul.f32 %v660, %v660
        %v731 = vmul.f32 %v662, %v662
        %v732 = vmul.f32 %v666, %v666
        %v733 = vmul.f32 %v668, %v668
        %v734 = vmul.f32 %v670, %v670
        %v735 = vmul.f32 %v672, %v672
        %v736 = vmul.f32 %v676, %v676
        %v737 = vmul.f32 %v678, %v678
        %v738 = vmul.f32 %v680, %v680
        %v739 = vmul.f32 %v682, %v682
        %v740 = vmul.f32 %v686, %v686
        %v741 = vmul.f32 %v688, %v688
        %v742 = vmul.f32 %v690, %v690
        %v743 = vmul.f32 %v692, %v692
        %v744 = vmul.f32 %v696, %v696
        %v745 = vmul.f32 %v698, %v698
        %v746 = vmul.f32 %v700, %v700
        %v747 = vmul.f32 %v702, %v702
        %v748 = vmul.f32 %v706, %v706
        %v749 = vmul.f32 %v708, %v708
        %v750 = vmul.f32 %v710, %v710
        %v751 = vmul.f32 %v712, %v712
        %v752 = vmul.f32 %v716, %v716
        %v753 = vmul.f32 %v718, %v718
        %v754 = vmul.f32 %v720, %v720
        %v755 = vmul.f32 %v722, %v722
        %v756 = vmul.f32 %v646, %v724
        %v757 = vmul.f32 %v648, %v725
        %v758 = vmul.f32 %v650, %v726
        %v759 = vmul.f32 %v652, %v727
        %v760 = vmul.f32 %v656, %v728
        %v761 = vmul.f32 %v658, %v729
        %v762 = vmul.f32 %v660, %v730
        %v763 = vmul.f32 %v662, %v731
        %v764 = vmul.f32 %v666, %v732
        %v765 = vmul.f32 %v668, %v733
        %v766 = vmul.f32 %v670, %v734
        %v767 = vmul.f32 %v672, %v735
        %v768 = vmul.f32 %v676, %v736
        %v769 = vmul.f32 %v678, %v737
        %v770 = vmul.f32 %v680, %v738
        %v771 = vmul.f32 %v682, %v739
        %v772 = vmul.f32 %v686, %v740
        %v773 = vmul.f32 %v688, %v741
        %v774 = vmul.f32 %v690, %v742
        %v775 = vmul.f32 %v692, %v743
        %v776 = vmul.f32 %v696, %v744
        %v777 = vmul.f32 %v698, %v745
        %v778 = vmul.f32 %v700, %v746
        %v779 = vmul.f32 %v702, %v747
        %v780 = vmul.f32 %v706, %v748
        %v781 = vmul.f32 %v708, %v749
        %v782 = vmul.f32 %v710, %v750
        %v783 = vmul.f32 %v712, %v751
        %v784 = vmul.f32 %v716, %v752
        %v785 = vmul.f32 %v718, %v753
        %v786 = vmul.f32 %v720, %v754
        %v787 = vmul.f32 %v722, %v755
        %v788 = vmul.f32 %v756, 0.044715
        %v789 = vmul.f32 %v757, 0.044715
        %v790 = vmul.f32 %v758, 0.044715
        %v791 = vmul.f32 %v759, 0.044715
        %v792 = vmul.f32 %v760, 0.044715
        %v793 = vmul.f32 %v761, 0.044715
        %v794 = vmul.f32 %v762, 0.044715
        %v795 = vmul.f32 %v763, 0.044715
        %v796 = vmul.f32 %v764, 0.044715
        %v797 = vmul.f32 %v765, 0.044715
        %v798 = vmul.f32 %v766, 0.044715
        %v799 = vmul.f32 %v767, 0.044715
        %v800 = vmul.f32 %v768, 0.044715
        %v801 = vmul.f32 %v769, 0.044715
        %v802 = vmul.f32 %v770, 0.044715
        %v803 = vmul.f32 %v771, 0.044715
        %v804 = vmul.f32 %v772, 0.044715
        %v805 = vmul.f32 %v773, 0.044715
        %v806 = vmul.f32 %v774, 0.044715
        %v807 = vmul.f32 %v775, 0.044715
        %v808 = vmul.f32 %v776, 0.044715
        %v809 = vmul.f32 %v777, 0.044715
        %v810 = vmul.f32 %v778, 0.044715
        %v811 = vmul.f32 %v779, 0.044715
        %v812 = vmul.f32 %v780, 0.044715
        %v813 = vmul.f32 %v781, 0.044715
        %v814 = vmul.f32 %v782, 0.044715
        %v815 = vmul.f32 %v783, 0.044715
        %v816 = vmul.f32 %v784, 0.044715
        %v817 = vmul.f32 %v785, 0.044715
        %v818 = vmul.f32 %v786, 0.044715
        %v819 = vmul.f32 %v787, 0.044715
        %v820 = vadd.f32 %v646, %v788
        %v821 = vadd.f32 %v648, %v789
        %v822 = vadd.f32 %v650, %v790
        %v823 = vadd.f32 %v652, %v791
        %v824 = vadd.f32 %v656, %v792
        %v825 = vadd.f32 %v658, %v793
        %v826 = vadd.f32 %v660, %v794
        %v827 = vadd.f32 %v662, %v795
        %v828 = vadd.f32 %v666, %v796
        %v829 = vadd.f32 %v668, %v797
        %v830 = vadd.f32 %v670, %v798
        %v831 = vadd.f32 %v672, %v799
        %v832 = vadd.f32 %v676, %v800
        %v833 = vadd.f32 %v678, %v801
        %v834 = vadd.f32 %v680, %v802
        %v835 = vadd.f32 %v682, %v803
        %v836 = vadd.f32 %v686, %v804
        %v837 = vadd.f32 %v688, %v805
        %v838 = vadd.f32 %v690, %v806
        %v839 = vadd.f32 %v692, %v807
        %v840 = vadd.f32 %v696, %v808
        %v841 = vadd.f32 %v698, %v809
        %v842 = vadd.f32 %v700, %v810
        %v843 = vadd.f32 %v702, %v811
        %v844 = vadd.f32 %v706, %v812
        %v845 = vadd.f32 %v708, %v813
        %v846 = vadd.f32 %v710, %v814
        %v847 = vadd.f32 %v712, %v815
        %v848 = vadd.f32 %v716, %v816
        %v849 = vadd.f32 %v718, %v817
        %v850 = vadd.f32 %v720, %v818
        %v851 = vadd.f32 %v722, %v819
        %v852 = vmul.f32 %v820, 0.7978846
        %v853 = vmul.f32 %v821, 0.7978846
        %v854 = vmul.f32 %v822, 0.7978846
        %v855 = vmul.f32 %v823, 0.7978846
        %v856 = vmul.f32 %v824, 0.7978846
        %v857 = vmul.f32 %v825, 0.7978846
        %v858 = vmul.f32 %v826, 0.7978846
        %v859 = vmul.f32 %v827, 0.7978846
        %v860 = vmul.f32 %v828, 0.7978846
        %v861 = vmul.f32 %v829, 0.7978846
        %v862 = vmul.f32 %v830, 0.7978846
        %v863 = vmul.f32 %v831, 0.7978846
        %v864 = vmul.f32 %v832, 0.7978846
        %v865 = vmul.f32 %v833, 0.7978846
        %v866 = vmul.f32 %v834, 0.7978846
        %v867 = vmul.f32 %v835, 0.7978846
        %v868 = vmul.f32 %v836, 0.7978846
        %v869 = vmul.f32 %v837, 0.7978846
        %v870 = vmul.f32 %v838, 0.7978846
        %v871 = vmul.f32 %v839, 0.7978846
        %v872 = vmul.f32 %v840, 0.7978846
        %v873 = vmul.f32 %v841, 0.7978846
        %v874 = vmul.f32 %v842, 0.7978846
        %v875 = vmul.f32 %v843, 0.7978846
        %v876 = vmul.f32 %v844, 0.7978846
        %v877 = vmul.f32 %v845, 0.7978846
        %v878 = vmul.f32 %v846, 0.7978846
        %v879 = vmul.f32 %v847, 0.7978846
        %v880 = vmul.f32 %v848, 0.7978846
        %v881 = vmul.f32 %v849, 0.7978846
        %v882 = vmul.f32 %v850, 0.7978846
        %v883 = vmul.f32 %v851, 0.7978846
        %v884 = vtanh.pop %v852
        %v885 = vtanh.pop %v853
        %v886 = vtanh.pop %v854
        %v887 = vtanh.pop %v855
        %v888 = vtanh.pop %v856
        %v889 = vtanh.pop %v857
        %v890 = vtanh.pop %v858
        %v891 = vtanh.pop %v859
        %v892 = vtanh.pop %v860
        %v893 = vtanh.pop %v861
        %v894 = vtanh.pop %v862
        %v895 = vtanh.pop %v863
        %v896 = vtanh.pop %v864
        %v897 = vtanh.pop %v865
        %v898 = vtanh.pop %v866
        %v899 = vtanh.pop %v867
        %v900 = vtanh.pop %v868
        %v901 = vtanh.pop %v869
        %v902 = vtanh.pop %v870
        %v903 = vtanh.pop %v871
        %v904 = vtanh.pop %v872
        %v905 = vtanh.pop %v873
        %v906 = vtanh.pop %v874
        %v907 = vtanh.pop %v875
        %v908 = vtanh.pop %v876
        %v909 = vtanh.pop %v877
        %v910 = vtanh.pop %v878
        %v911 = vtanh.pop %v879
        %v912 = vtanh.pop %v880
        %v913 = vtanh.pop %v881
        %v914 = vtanh.pop %v882
        %v915 = vtanh.pop %v883
        %v916 = vadd.f32 %v884, 1.0
        %v917 = vadd.f32 %v885, 1.0
        %v918 = vadd.f32 %v886, 1.0
        %v919 = vadd.f32 %v887, 1.0
        %v920 = vadd.f32 %v888, 1.0
        %v921 = vadd.f32 %v889, 1.0
        %v922 = vadd.f32 %v890, 1.0
        %v923 = vadd.f32 %v891, 1.0
        %v924 = vadd.f32 %v892, 1.0
        %v925 = vadd.f32 %v893, 1.0
        %v926 = vadd.f32 %v894, 1.0
        %v927 = vadd.f32 %v895, 1.0
        %v928 = vadd.f32 %v896, 1.0
        %v929 = vadd.f32 %v897, 1.0
        %v930 = vadd.f32 %v898, 1.0
        %v931 = vadd.f32 %v899, 1.0
        %v932 = vadd.f32 %v900, 1.0
        %v933 = vadd.f32 %v901, 1.0
        %v934 = vadd.f32 %v902, 1.0
        %v935 = vadd.f32 %v903, 1.0
        %v936 = vadd.f32 %v904, 1.0
        %v937 = vadd.f32 %v905, 1.0
        %v938 = vadd.f32 %v906, 1.0
        %v939 = vadd.f32 %v907, 1.0
        %v940 = vadd.f32 %v908, 1.0
        %v941 = vadd.f32 %v909, 1.0
        %v942 = vadd.f32 %v910, 1.0
        %v943 = vadd.f32 %v911, 1.0
        %v944 = vadd.f32 %v912, 1.0
        %v945 = vadd.f32 %v913, 1.0
        %v946 = vadd.f32 %v914, 1.0
        %v947 = vadd.f32 %v915, 1.0
        %v948 = vmul.f32 %v916, 0.5
        %v949 = vmul.f32 %v917, 0.5
        %v950 = vmul.f32 %v918, 0.5
        %v951 = vmul.f32 %v919, 0.5
        %v952 = vmul.f32 %v920, 0.5
        %v953 = vmul.f32 %v921, 0.5
        %v954 = vmul.f32 %v922, 0.5
        %v955 = vmul.f32 %v923, 0.5
        %v956 = vmul.f32 %v924, 0.5
        %v957 = vmul.f32 %v925, 0.5
        %v958 = vmul.f32 %v926, 0.5
        %v959 = vmul.f32 %v927, 0.5
        %v960 = vmul.f32 %v928, 0.5
        %v961 = vmul.f32 %v929, 0.5
        %v962 = vmul.f32 %v930, 0.5
        %v963 = vmul.f32 %v931, 0.5
        %v964 = vmul.f32 %v932, 0.5
        %v965 = vmul.f32 %v933, 0.5
        %v966 = vmul.f32 %v934, 0.5
        %v967 = vmul.f32 %v935, 0.5
        %v968 = vmul.f32 %v936, 0.5
        %v969 = vmul.f32 %v937, 0.5
        %v970 = vmul.f32 %v938, 0.5
        %v971 = vmul.f32 %v939, 0.5
        %v972 = vmul.f32 %v940, 0.5
        %v973 = vmul.f32 %v941, 0.5
        %v974 = vmul.f32 %v942, 0.5
        %v975 = vmul.f32 %v943, 0.5
        %v976 = vmul.f32 %v944, 0.5
        %v977 = vmul.f32 %v945, 0.5
        %v978 = vmul.f32 %v946, 0.5
        %v979 = vmul.f32 %v947, 0.5
        %v980 = vmul.f32 %v646, %v948
        %v981 = vmul.f32 %v648, %v949
        %v982 = vmul.f32 %v650, %v950
        %v983 = vmul.f32 %v652, %v951
        %v984 = vmul.f32 %v656, %v952
        %v985 = vmul.f32 %v658, %v953
        %v986 = vmul.f32 %v660, %v954
        %v987 = vmul.f32 %v662, %v955
        %v988 = vmul.f32 %v666, %v956
        %v989 = vmul.f32 %v668, %v957
        %v990 = vmul.f32 %v670, %v958
        %v991 = vmul.f32 %v672, %v959
        %v992 = vmul.f32 %v676, %v960
        %v993 = vmul.f32 %v678, %v961
        %v994 = vmul.f32 %v680, %v962
        %v995 = vmul.f32 %v682, %v963
        %v996 = vmul.f32 %v686, %v964
        %v997 = vmul.f32 %v688, %v965
        %v998 = vmul.f32 %v690, %v966
        %v999 = vmul.f32 %v692, %v967
        %v1000 = vmul.f32 %v696, %v968
        %v1001 = vmul.f32 %v698, %v969
        %v1002 = vmul.f32 %v700, %v970
        %v1003 = vmul.f32 %v702, %v971
        %v1004 = vmul.f32 %v706, %v972
        %v1005 = vmul.f32 %v708, %v973
        %v1006 = vmul.f32 %v710, %v974
        %v1007 = vmul.f32 %v712, %v975
        %v1008 = vmul.f32 %v716, %v976
        %v1009 = vmul.f32 %v718, %v977
        %v1010 = vmul.f32 %v720, %v978
        %v1011 = vmul.f32 %v722, %v979
        %v1012 = vld [vmem:[#allocation2] sm:$0xff]
        %v1013 = vld [vmem:[#allocation2 + $0x8] sm:$0xff]
        %v1014 = vld [vmem:[#allocation2 + $0x10] sm:$0xff]
        %v1015 = vld [vmem:[#allocation2 + $0x18] sm:$0xff]
        %v1016 = vld [vmem:[#allocation2 + $0x20] sm:$0xff]
        %v1017 = vld [vmem:[#allocation2 + $0x28] sm:$0xff]
        %v1018 = vld [vmem:[#allocation2 + $0x30] sm:$0xff]
        %v1019 = vld [vmem:[#allocation2 + $0x38] sm:$0xff]
        %v1020 = vld [vmem:[#allocation2 + $0x40] sm:$0xff]
        %v1021 = vld [vmem:[#allocation2 + $0x48] sm:$0xff]
        %v1022 = vld [vmem:[#allocation2 + $0x50] sm:$0xff]
        %v1023 = vld [vmem:[#allocation2 + $0x58] sm:$0xff]
        %v1024 = vld [vmem:[#allocation2 + $0x60] sm:$0xff]
        %v1025 = vld [vmem:[#allocation2 + $0x68] sm:$0xff]
        %v1026 = vld [vmem:[#allocation2 + $0x70] sm:$0xff]
        %v1027 = vld [vmem:[#allocation2 + $0x78] sm:$0xff]
        %v1028 = vpack.c.bf16 %v982, %v980
        %v1029 = vpack.c.bf16 %v983, %v981
        %v1030 = vpack.c.bf16 %v986, %v984
        %v1031 = vpack.c.bf16 %v987, %v985
        %v1032 = vpack.c.bf16 %v990, %v988
        %v1033 = vpack.c.bf16 %v991, %v989
        %v1034 = vpack.c.bf16 %v994, %v992
        %v1035 = vpack.c.bf16 %v995, %v993
        %v1036 = vpack.c.bf16 %v998, %v996
        %v1037 = vpack.c.bf16 %v999, %v997
        %v1038 = vpack.c.bf16 %v1002, %v1000
        %v1039 = vpack.c.bf16 %v1003, %v1001
        %v1040 = vpack.c.bf16 %v1006, %v1004
        %v1041 = vpack.c.bf16 %v1007, %v1005
        %v1042 = vpack.c.bf16 %v1010, %v1008
        %v1043 = vpack.c.bf16 %v1011, %v1009
        %v1044 = vld [vmem:[%s346] sm:$0xf]
        %v1045 = vld [vmem:[%s346 + $0x4] sm:$0xf]
        %v1046 = vld [vmem:[%s346 + $0x8] sm:$0xf]
        %v1047 = vld [vmem:[%s346 + $0xc] sm:$0xf]
        %v1048 = vld [vmem:[%s346 + $0x10] sm:$0xf]
        %v1049 = vld [vmem:[%s346 + $0x14] sm:$0xf]
        %v1050 = vld [vmem:[%s346 + $0x18] sm:$0xf]
        %v1051 = vld [vmem:[%s346 + $0x1c] sm:$0xf]
        %v1052 = vld [vmem:[%s346 + $0x20] sm:$0xf]
        %v1053 = vld [vmem:[%s346 + $0x24] sm:$0xf]
        %v1054 = vld [vmem:[%s346 + $0x28] sm:$0xf]
        %v1055 = vld [vmem:[%s346 + $0x2c] sm:$0xf]
        %v1056 = vld [vmem:[%s346 + $0x30] sm:$0xf]
        %v1057 = vld [vmem:[%s346 + $0x34] sm:$0xf]
        %v1058 = vld [vmem:[%s346 + $0x38] sm:$0xf]
        %v1059 = vld [vmem:[%s346 + $0x3c] sm:$0xf]
        %v1060 = vld [vmem:[%s346 + $0x40] sm:$0xf]
        %v1061 = vld [vmem:[%s346 + $0x44] sm:$0xf]
        %v1062 = vld [vmem:[%s346 + $0x48] sm:$0xf]
        %v1063 = vld [vmem:[%s346 + $0x4c] sm:$0xf]
        %v1064 = vld [vmem:[%s346 + $0x50] sm:$0xf]
        %v1065 = vld [vmem:[%s346 + $0x54] sm:$0xf]
        %v1066 = vld [vmem:[%s346 + $0x58] sm:$0xf]
        %v1067 = vld [vmem:[%s346 + $0x5c] sm:$0xf]
        %v1068 = vld [vmem:[%s346 + $0x60] sm:$0xf]
        %v1069 = vld [vmem:[%s346 + $0x64] sm:$0xf]
        %v1070 = vld [vmem:[%s346 + $0x68] sm:$0xf]
        %v1071 = vld [vmem:[%s346 + $0x6c] sm:$0xf]
        %v1072 = vld [vmem:[%s346 + $0x70] sm:$0xf]
        %v1073 = vld [vmem:[%s346 + $0x74] sm:$0xf]
        %v1074 = vld [vmem:[%s346 + $0x78] sm:$0xf]
        %v1075 = vld [vmem:[%s346 + $0x7c] sm:$0xf]
        %v1108 = vunpack.c.l.b16 %v1044
        %v1109 = vunpack.c.l.b16 %v1045
        %v1110 = vunpack.c.l.b16 %v1046
        %v1111 = vunpack.c.l.b16 %v1047
        %v1112 = vunpack.c.l.b16 %v1048
        %v1113 = vunpack.c.l.b16 %v1049
        %v1114 = vunpack.c.l.b16 %v1050
        %v1115 = vunpack.c.l.b16 %v1051
        %v1116 = vunpack.c.l.b16 %v1052
        %v1117 = vunpack.c.l.b16 %v1053
        %v1118 = vunpack.c.l.b16 %v1054
        %v1119 = vunpack.c.l.b16 %v1055
        %v1120 = vunpack.c.l.b16 %v1056
        %v1121 = vunpack.c.l.b16 %v1057
        %v1122 = vunpack.c.l.b16 %v1058
        %v1123 = vunpack.c.l.b16 %v1059
        %v1124 = vunpack.c.l.b16 %v1060
        %v1125 = vunpack.c.l.b16 %v1061
        %v1126 = vunpack.c.l.b16 %v1062
        %v1127 = vunpack.c.l.b16 %v1063
        %v1128 = vunpack.c.l.b16 %v1064
        %v1129 = vunpack.c.l.b16 %v1065
        %v1130 = vunpack.c.l.b16 %v1066
        %v1131 = vunpack.c.l.b16 %v1067
        %v1132 = vunpack.c.l.b16 %v1068
        %v1133 = vunpack.c.l.b16 %v1069
        %v1134 = vunpack.c.l.b16 %v1070
        %v1135 = vunpack.c.l.b16 %v1071
        %v1136 = vunpack.c.l.b16 %v1072
        %v1137 = vunpack.c.l.b16 %v1073
        %v1138 = vunpack.c.l.b16 %v1074
        %v1139 = vunpack.c.l.b16 %v1075
        %v1140 = vpack.c.b16 %v1109, %v1108
        %v1141 = vpack.c.b16 %v1111, %v1110
        %v1142 = vpack.c.b16 %v1113, %v1112
        %v1143 = vpack.c.b16 %v1115, %v1114
        %v1144 = vpack.c.b16 %v1117, %v1116
        %v1145 = vpack.c.b16 %v1119, %v1118
        %v1146 = vpack.c.b16 %v1121, %v1120
        %v1147 = vpack.c.b16 %v1123, %v1122
        %v1148 = vpack.c.b16 %v1125, %v1124
        %v1149 = vpack.c.b16 %v1127, %v1126
        %v1150 = vpack.c.b16 %v1129, %v1128
        %v1151 = vpack.c.b16 %v1131, %v1130
        %v1152 = vpack.c.b16 %v1133, %v1132
        %v1153 = vpack.c.b16 %v1135, %v1134
        %v1154 = vpack.c.b16 %v1137, %v1136
        %v1155 = vpack.c.b16 %v1139, %v1138
        %1172 = vmatprep.subr.bf16.mxu0 0
        %1173 = vmatpush1.bf16.msra.mxu0 %v1147
        %1174 = vmatprep.subr.bf16.mxu0 0
        %1175 = vmatpush1.bf16.msra.mxu0 %v1146
        %1176 = vmatprep.subr.bf16.mxu0 0
        %1177 = vmatpush1.bf16.msra.mxu0 %v1145
        %1178 = vmatprep.subr.bf16.mxu0 0
        %1179 = vmatpush1.bf16.msra.mxu0 %v1144
        %1180 = vmatprep.subr.bf16.mxu0 0
        %1181 = vmatpush1.bf16.msra.mxu0 %v1143
        %1182 = vmatprep.subr.bf16.mxu0 0
        %1183 = vmatpush1.bf16.msra.mxu0 %v1142
        %1184 = vmatprep.subr.bf16.mxu0 0
        %1185 = vmatpush1.bf16.msra.mxu0 %v1141
        %1186 = vmatprep.subr.bf16.mxu0 0
        %1187 = vmatpush1.bf16.msra.mxu0 %v1140
        %1188 = vmatprep.subr.bf16.mxu0 0
        %1189 = vmatpush2.bf16.msra.mxu0 %v1155
        %1190 = vmatprep.subr.bf16.mxu0 0
        %1191 = vmatpush2.bf16.msra.mxu0 %v1154
        %1192 = vmatprep.subr.bf16.mxu0 0
        %1193 = vmatpush2.bf16.msra.mxu0 %v1153
        %1194 = vmatprep.subr.bf16.mxu0 0
        %1195 = vmatpush2.bf16.msra.mxu0 %v1152
        %1196 = vmatprep.subr.bf16.mxu0 0
        %1197 = vmatpush2.bf16.msra.mxu0 %v1151
        %1198 = vmatprep.subr.bf16.mxu0 0
        %1199 = vmatpush2.bf16.msra.mxu0 %v1150
        %1200 = vmatprep.subr.bf16.mxu0 0
        %1201 = vmatpush2.bf16.msra.mxu0 %v1149
        %1202 = vmatprep.subr.bf16.mxu0 0
        %1203 = vmatpush2.bf16.msra.mxu0 %v1148
        %1204 = vmatprep.mubr.bf16.mxu0 %v1029
        %1205 = vmatmul.mubr.bf16.gmra.mxu0 %v1028
        %v1206 = vpop.f32.mrf.mxu0
        %v1207 = vadd.f32 0.0, %v1206
        %v1208 = vpop.f32.mrf.mxu0
        %v1209 = vpop.f32.mrf.mxu0
        %v1210 = vadd.f32 0.0, %v1209
        %v1211 = vpop.f32.mrf.mxu0
        %1212 = vmatprep.mubr.bf16.mxu0 %v1031
        %1213 = vmatmul.mubr.bf16.gmra.mxu0 %v1030
        %v1214 = vpop.f32.mrf.mxu0
        %v1215 = vadd.f32 0.0, %v1214
        %v1216 = vpop.f32.mrf.mxu0
        %v1217 = vpop.f32.mrf.mxu0
        %v1218 = vadd.f32 0.0, %v1217
        %v1219 = vpop.f32.mrf.mxu0
        %1220 = vmatprep.mubr.bf16.mxu0 %v1033
        %1221 = vmatmul.mubr.bf16.gmra.mxu0 %v1032
        %v1222 = vpop.f32.mrf.mxu0
        %v1223 = vadd.f32 0.0, %v1222
        %v1224 = vpop.f32.mrf.mxu0
        %v1225 = vpop.f32.mrf.mxu0
        %v1226 = vadd.f32 0.0, %v1225
        %v1227 = vpop.f32.mrf.mxu0
        %1228 = vmatprep.mubr.bf16.mxu0 %v1035
        %1229 = vmatmul.mubr.bf16.gmra.mxu0 %v1034
        %v1230 = vpop.f32.mrf.mxu0
        %v1231 = vadd.f32 0.0, %v1230
        %v1232 = vpop.f32.mrf.mxu0
        %v1233 = vpop.f32.mrf.mxu0
        %v1234 = vadd.f32 0.0, %v1233
        %v1235 = vpop.f32.mrf.mxu0
        %1236 = vmatprep.mubr.bf16.mxu0 %v1037
        %1237 = vmatmul.mubr.bf16.gmra.mxu0 %v1036
        %v1238 = vpop.f32.mrf.mxu0
        %v1239 = vadd.f32 0.0, %v1238
        %v1240 = vpop.f32.mrf.mxu0
        %v1241 = vpop.f32.mrf.mxu0
        %v1242 = vadd.f32 0.0, %v1241
        %v1243 = vpop.f32.mrf.mxu0
        %1244 = vmatprep.mubr.bf16.mxu0 %v1039
        %1245 = vmatmul.mubr.bf16.gmra.mxu0 %v1038
        %v1246 = vpop.f32.mrf.mxu0
        %v1247 = vadd.f32 0.0, %v1246
        %v1248 = vpop.f32.mrf.mxu0
        %v1249 = vpop.f32.mrf.mxu0
        %v1250 = vadd.f32 0.0, %v1249
        %v1251 = vpop.f32.mrf.mxu0
        %1252 = vmatprep.mubr.bf16.mxu0 %v1041
        %1253 = vmatmul.mubr.bf16.gmra.mxu0 %v1040
        %v1254 = vpop.f32.mrf.mxu0
        %v1255 = vadd.f32 0.0, %v1254
        %v1256 = vpop.f32.mrf.mxu0
        %v1257 = vpop.f32.mrf.mxu0
        %v1258 = vadd.f32 0.0, %v1257
        %v1259 = vpop.f32.mrf.mxu0
        %1260 = vmatprep.mubr.bf16.mxu0 %v1043
        %1261 = vmatmul.mubr.bf16.gmra.mxu0 %v1042
        %v1262 = vpop.f32.mrf.mxu0
        %v1263 = vadd.f32 0.0, %v1262
        %v1264 = vpop.f32.mrf.mxu0
        %v1265 = vpop.f32.mrf.mxu0
        %v1266 = vadd.f32 0.0, %v1265
        %v1267 = vpop.f32.mrf.mxu0
        %1268 = vdwg.mxu0
        %v1269 = vadd.f32 %v1012, %v1207
        %v1270 = vadd.f32 %v1013, %v1210
        %v1271 = vadd.f32 %v1014, %v1215
        %v1272 = vadd.f32 %v1015, %v1218
        %v1273 = vadd.f32 %v1016, %v1223
        %v1274 = vadd.f32 %v1017, %v1226
        %v1275 = vadd.f32 %v1018, %v1231
        %v1276 = vadd.f32 %v1019, %v1234
        %v1277 = vadd.f32 %v1020, %v1239
        %v1278 = vadd.f32 %v1021, %v1242
        %v1279 = vadd.f32 %v1022, %v1247
        %v1280 = vadd.f32 %v1023, %v1250
        %v1281 = vadd.f32 %v1024, %v1255
        %v1282 = vadd.f32 %v1025, %v1258
        %v1283 = vadd.f32 %v1026, %v1263
        %v1284 = vadd.f32 %v1027, %v1266
        %1285 = vst [vmem:[#allocation2] sm:$0xff] %v1269
        %1286 = vst [vmem:[#allocation2 + $0x8] sm:$0xff] %v1270
        %1287 = vst [vmem:[#allocation2 + $0x10] sm:$0xff] %v1271
        %1288 = vst [vmem:[#allocation2 + $0x18] sm:$0xff] %v1272
        %1289 = vst [vmem:[#allocation2 + $0x20] sm:$0xff] %v1273
        %1290 = vst [vmem:[#allocation2 + $0x28] sm:$0xff] %v1274
        %1291 = vst [vmem:[#allocation2 + $0x30] sm:$0xff] %v1275
        %1292 = vst [vmem:[#allocation2 + $0x38] sm:$0xff] %v1276
        %1293 = vst [vmem:[#allocation2 + $0x40] sm:$0xff] %v1277
        %1294 = vst [vmem:[#allocation2 + $0x48] sm:$0xff] %v1278
        %1295 = vst [vmem:[#allocation2 + $0x50] sm:$0xff] %v1279
        %1296 = vst [vmem:[#allocation2 + $0x58] sm:$0xff] %v1280
        %1297 = vst [vmem:[#allocation2 + $0x60] sm:$0xff] %v1281
        %1298 = vst [vmem:[#allocation2 + $0x68] sm:$0xff] %v1282
        %1299 = vst [vmem:[#allocation2 + $0x70] sm:$0xff] %v1283
        %1300 = vst [vmem:[#allocation2 + $0x78] sm:$0xff] %v1284
        // Predicated region
        $region57: #{tpu_custom_call.1} parent=39 // pred_check
          %p1301 = pneg %p419
        $region58: #{tpu_custom_call.1} parent=39 // pred_check_branch
          %1303 = sbr.rel (%p1301) target = $region60
        $region59: #{tpu_custom_call.1} parent=39 // pred_region
          %v1304 = vld [vmem:[#allocation2] sm:$0xff]
          %v1305 = vld [vmem:[#allocation2 + $0x8] sm:$0xff]
          %v1306 = vld [vmem:[#allocation2 + $0x10] sm:$0xff]
          %v1307 = vld [vmem:[#allocation2 + $0x18] sm:$0xff]
          %v1308 = vld [vmem:[#allocation2 + $0x20] sm:$0xff]
          %v1309 = vld [vmem:[#allocation2 + $0x28] sm:$0xff]
          %v1310 = vld [vmem:[#allocation2 + $0x30] sm:$0xff]
          %v1311 = vld [vmem:[#allocation2 + $0x38] sm:$0xff]
          %v1312 = vld [vmem:[#allocation2 + $0x40] sm:$0xff]
          %v1313 = vld [vmem:[#allocation2 + $0x48] sm:$0xff]
          %v1314 = vld [vmem:[#allocation2 + $0x50] sm:$0xff]
          %v1315 = vld [vmem:[#allocation2 + $0x58] sm:$0xff]
          %v1316 = vld [vmem:[#allocation2 + $0x60] sm:$0xff]
          %v1317 = vld [vmem:[#allocation2 + $0x68] sm:$0xff]
          %v1318 = vld [vmem:[#allocation2 + $0x70] sm:$0xff]
          %v1319 = vld [vmem:[#allocation2 + $0x78] sm:$0xff]
          %v1320 = vld [vmem:[%s415] sm:$0x1]
          %v1322 = vlaneseq
          %v1323 = vshrl.u32 %v1322, 7
          %v1324 = vsub.s32 0, %v1323
          %v1325 = vrot.slane %v1320, %v1324
          %v1327 = vadd.f32 %v1304, %v1325
          %v1328 = vadd.f32 %v1305, %v1325
          %v1329 = vadd.f32 %v1306, %v1325
          %v1330 = vadd.f32 %v1307, %v1325
          %v1331 = vadd.f32 %v1308, %v1325
          %v1332 = vadd.f32 %v1309, %v1325
          %v1333 = vadd.f32 %v1310, %v1325
          %v1334 = vadd.f32 %v1311, %v1325
          %v1335 = vadd.f32 %v1312, %v1325
          %v1336 = vadd.f32 %v1313, %v1325
          %v1337 = vadd.f32 %v1314, %v1325
          %v1338 = vadd.f32 %v1315, %v1325
          %v1339 = vadd.f32 %v1316, %v1325
          %v1340 = vadd.f32 %v1317, %v1325
          %v1341 = vadd.f32 %v1318, %v1325
          %v1342 = vadd.f32 %v1319, %v1325
          %1343 = vst [vmem:[%s395] sm:$0xff] %v1327
          %1344 = vst [vmem:[%s395 + $0x8] sm:$0xff] %v1328
          %1345 = vst [vmem:[%s395 + $0x10] sm:$0xff] %v1329
          %1346 = vst [vmem:[%s395 + $0x18] sm:$0xff] %v1330
          %1347 = vst [vmem:[%s395 + $0x20] sm:$0xff] %v1331
          %1348 = vst [vmem:[%s395 + $0x28] sm:$0xff] %v1332
          %1349 = vst [vmem:[%s395 + $0x30] sm:$0xff] %v1333
          %1350 = vst [vmem:[%s395 + $0x38] sm:$0xff] %v1334
          %1351 = vst [vmem:[%s395 + $0x40] sm:$0xff] %v1335
          %1352 = vst [vmem:[%s395 + $0x48] sm:$0xff] %v1336
          %1353 = vst [vmem:[%s395 + $0x50] sm:$0xff] %v1337
          %1354 = vst [vmem:[%s395 + $0x58] sm:$0xff] %v1338
          %1355 = vst [vmem:[%s395 + $0x60] sm:$0xff] %v1339
          %1356 = vst [vmem:[%s395 + $0x68] sm:$0xff] %v1340
          %1357 = vst [vmem:[%s395 + $0x70] sm:$0xff] %v1341
          %1358 = vst [vmem:[%s395 + $0x78] sm:$0xff] %v1342
        $region60: #{tpu_custom_call.1} parent=39 // pred_fallthru
          _
        %s1359 = sand.u32 %s194, 1
        %s1360 = scalar_lea.sflag [#allocation7], %s1359
        %s1361 = sand.u32 %s194, 1
        %s1362 = smul.addr %s1361, 128
        %s1363 = scalar_lea.vmem [#allocation11], %s1362
        // Predicated region
        $region61: #{tpu_custom_call.1} parent=39 // pred_check
          %p1364 = pneg %p204
        $region62: #{tpu_custom_call.1} parent=39 // pred_check_branch
          %1366 = sbr.rel (%p1364) target = $region64
        $region63: #{tpu_custom_call.1} parent=39 // pred_region
          %s1367 = smul.u32 16, %s34
          %s1369 = ssub.s32 2048, 2048
          %1370 = vsyncadd %s1360, %s1369
          %s1371 = smul.addr %s1367, 128
          %s1372 = scalar_lea.hbm %s6, %s1371
          %s1373 = sshll.u32 %s1363, 4
          %s1374 = int_to_ptr.vmem [resolvable:$true] %s1373
          %1379 = dma.vmem_to_hbm [thread:$0]  %s1374, 2048, %s1372, %s1360, 128, 128, 8
        $region64: #{tpu_custom_call.1} parent=39 // pred_fallthru
          _
      $region40: #{tpu_custom_call.1} parent=5 // pred_fallthru
        _
      %p1380 = scmp.le.s32.totalorder 2, %s25
      // Predicated region
      $region65: #{tpu_custom_call.1} parent=5 // pred_check
        %p1381 = pneg %p1380
      $region66: #{tpu_custom_call.1} parent=5 // pred_check_branch
        %1383 = sbr.rel (%p1381) target = $region68
      $region67: #{tpu_custom_call.1} parent=5 // pred_region
        %s1384 = ssub.s32 %s25, 2
        // Predicated region
        $region69: #{tpu_custom_call.1} parent=67 // pred_check
          %p1385 = pneg %p210
        $region70: #{tpu_custom_call.1} parent=67 // pred_check_branch
          %1387 = sbr.rel (%p1385) target = $region72
        $region71: #{tpu_custom_call.1} parent=67 // pred_region
          %s1388 = sand.u32 %s195, 1
          %s1389 = scalar_lea.sflag [#allocation7], %s1388
          %s1390 = sand.u32 %s195, 1
          %s1391 = smul.addr %s1390, 128
          %s1392 = scalar_lea.vmem [#allocation11], %s1391
          %1393 = dma.done %s1389, 2048
        $region72: #{tpu_custom_call.1} parent=67 // pred_fallthru
          _
      $region68: #{tpu_custom_call.1} parent=5 // pred_fallthru
        _
    $region6: #{tpu_custom_call.1} parent=1 // loop_footer
      %s29 = sadd.s32 1, %s25
    $region7: #{tpu_custom_call.1} parent=1 // loop_footer_branch
      %24 = sbr.rel target = $region3
    $region8: #{tpu_custom_call.1} parent=1 // loop_exit
      _
    %1394 = vsyncpa [#allocation6], 1
    %s1395 = scalar_lea.sflag [#allocation6], 1
    %1396 = vsyncpa %s1395, 1
    %1397 = vsyncpa [#allocation9], 1
    %s1398 = scalar_lea.sflag [#allocation9], 1
    %1399 = vsyncpa %s1398, 1
    %1400 = vsyncpa [#allocation7], 1
    %s1401 = scalar_lea.sflag [#allocation7], 1
    %1402 = vsyncpa %s1401, 1

</llo_original>
